<compile_context>
chip_gen: v6e
topology: v6e:2x2x1
jax: 0.10.0
libtpu: 0.0.40
codegen_flags: <defaults>
</compile_context>

<pallas_src>
import functools

import jax
import jax.numpy as jnp
from jax import lax
from jax.experimental import pallas as pl
from jax.experimental.pallas import tpu as pltpu


def mlp_kernel(x_ref, w1_ref, b1_ref, w2_ref, b2_ref, o_ref, acc_ref):
    # x_ref:  (TB, TK)   batch/K tile of the input (f32 or bf16)
    # w1_ref: (TK, H2)   fc1 weight tile, (in, out) layout (f32 or bf16)
    # b1_ref: (1, H2)    fc1 bias (f32, resident)
    # w2_ref: (1, H2)    fc2 weight row (f32, resident)
    # b2_ref: (1,)       fc2 bias scalar in SMEM
    # o_ref:  (1, TB)    lane-dense output row
    # acc_ref:(TB, H2)   f32 accumulator for the K-tiled fc1 matmul
    k = pl.program_id(1)

    @pl.when(k == 0)
    def _():
        acc_ref[...] = jnp.zeros_like(acc_ref)

    # fc1 partial product on the MXU (batch fills the M rows), f32 accumulate.
    acc_ref[...] += jnp.dot(x_ref[...], w1_ref[...],
                            preferred_element_type=jnp.float32)

    @pl.when(k == pl.num_programs(1) - 1)
    def _():
        # bias + ReLU in f32 on the VPU.
        h = jnp.maximum(acc_ref[...] + b1_ref[...], 0.0)
        # fc2: (1, H2) . (TB, H2)^T -> (1, TB).  Batch lands in the lane
        # dimension, so the store is a full-width unmasked vst (no N=1 matmul,
        # no width-1 output block).  Note: for nk==1 configs the contraction
        # may lower with an XLU transpose of h; second-order per review.
        out = lax.dot_general(w2_ref[...], h,
                              dimension_numbers=(((1,), (1,)), ((), ())),
                              preferred_element_type=jnp.float32)
        o_ref[...] = (out + b2_ref[0]).astype(o_ref.dtype)


def prepare_params(w1, b1, w2, b2, compute_dtype=jnp.float32):
    """One-time torch-layout -> kernel-layout conversion.

    The fc1 weight is transposed AND cast to the MXU compute dtype here (once),
    so no per-forward-call convert pass over the weight is needed.  bf16 is a
    good choice on v5e/v6e/v7x: the MXU is bf16-native on all three, and all
    elementwise work (bias, ReLU, fc2 epilogue) stays f32 inside the kernel.
    """
    w1 = jnp.asarray(w1, jnp.float32)
    return dict(
        w1t=w1.T.astype(compute_dtype),                    # (H, H2), compute dtype
        b1=jnp.asarray(b1, jnp.float32).reshape(1, -1),    # (1, H2)
        w2=jnp.asarray(w2, jnp.float32).reshape(1, -1),    # (1, H2)
        b2=jnp.asarray(b2, jnp.float32).reshape(1),        # (1,)
    )


def _vmem_capacity_bytes():
    try:
        return int(pltpu.get_tpu_info().vmem_capacity_bytes)
    except Exception:
        return 64 << 20  # conservative fallback: v7x per-TensorCore VMEM


@functools.partial(jax.jit, static_argnames=("tile_b", "tile_k"))
def mlp_forward(x, w1t, b1, w2, b2, *, tile_b=256, tile_k=1024):
    """x: (B, H) f32; params in kernel layout (see prepare_params). Returns (B, 1)."""
    B, H = x.shape
    H_w, H2 = w1t.shape
    assert H_w == H, (H_w, H)

    # Compute dtype is whatever prepare_params baked into the weight; only x
    # is cast per call (cheap relative to the weight stream for typical B).
    cdtype = w1t.dtype
    if x.dtype != cdtype:
        x = x.astype(cdtype)
    w_is = jnp.dtype(cdtype).itemsize
    x_is = w_is

    # ---- VMEM budget, re-derived per chip (64 MiB on v7x, 128 MiB v5e/v6e) --
    cap = _vmem_capacity_bytes()
    tile_budget = min(int(cap * 0.55), 72 << 20)   # tiles + double buffers + acc
    vmem_limit = max(32 << 20, min(int(cap * 0.85), 112 << 20))

    # ---- batch (M) tiling -- no wrapper-side padding of x ------------------
    assert tile_b % 128 == 0, "tile_b must be a multiple of 128"
    if B <= tile_b:
        tb = B                       # one exact tile; block dims == array dims
        # v7x megacore: if the batch splits evenly into two 128-multiple tiles,
        # use two tiles so the "parallel" axis shards across both TensorCores.
        if B >= 256 and B % 256 == 0:
            tb = B // 2
    else:
        tb = tile_b                  # multiple of 128; ragged last tile is
        # handled by Pallas masked boundary blocks (OOB reads are discarded
        # because each output row depends only on its own input row).
    nb = -(-B // tb)

    # ---- hidden (K) tiling --------------------------------------------------
    acc_bytes = tb * H2 * 4
    small_bytes = 2 * H2 * 4 + 64 * 1024          # b1, w2, output row + slack

    def fits(tk_, nbuf=2):
        return (nbuf * tk_ * H2 * w_is            # w1 tile(s)
                + nbuf * tb * tk_ * x_is          # x tile(s)
                + acc_bytes + small_bytes) <= tile_budget

    if H <= tile_k and fits(H):
        tk = H        # fc1 weight fully resident in VMEM: DMA'd from HBM once.
    else:
        # Fall back to K tiling: largest 128-multiple divisor of H that fits.
        # (The weight is then re-streamed once per batch tile.)
        tk = None
        for cand in range(min(H, tile_k) - (min(H, tile_k) % 128), 0, -128):
            if cand > 0 and H % cand == 0 and fits(cand):
                tk = cand
                break
        if tk is None:
            # TODO(synk): add an H2 (N) tiling axis for very wide hidden layers
            # so (tk, H2) weight blocks and the (tb, H2) accumulator stop
            # scaling with H2; needed before shapes this wide fit 64 MiB VMEM.
            raise ValueError(
                f"No valid K tile for H={H}, H2={H2} within the "
                f"{tile_budget >> 20} MiB VMEM tile budget.")
    nk = H // tk

    # ---- deeper pipelining on long weight streams, if headroom exists ------
    deep = (nk >= 3) and fits(tk, nbuf=3)
    if deep:
        x_spec = pl.BlockSpec((tb, tk), lambda i, k: (i, k),
                              pipeline_mode=pl.Buffered(3))
        w1_spec = pl.BlockSpec((tk, H2), lambda i, k: (k, 0),
                               pipeline_mode=pl.Buffered(3))
    else:
        x_spec = pl.BlockSpec((tb, tk), lambda i, k: (i, k))
        w1_spec = pl.BlockSpec((tk, H2), lambda i, k: (k, 0))

    # ---- cost estimate (counts weight re-streaming when K-tiled) -----------
    w1_reads = 1 if nk == 1 else nb
    bytes_accessed = (B * H * x_is
                      + w1_reads * H * H2 * w_is
                      + b1.size * 4 + w2.size * 4 + b2.size * 4
                      + B * 4)
    cost = pl.CostEstimate(
        flops=2 * B * H * H2 + 2 * B * H2,
        transcendentals=0,
        bytes_accessed=bytes_accessed,
    )

    out_row = pl.pallas_call(
        mlp_kernel,
        out_shape=jax.ShapeDtypeStruct((1, B), jnp.float32),
        grid=(nb, nk),
        in_specs=[
            x_spec,                                             # x batch/K tile
            w1_spec,                                            # fc1 weight tile
            pl.BlockSpec((1, H2), lambda i, k: (0, 0)),         # fc1 bias (resident)
            pl.BlockSpec((1, H2), lambda i, k: (0, 0)),         # fc2 weight row
            pl.BlockSpec(memory_space=pltpu.MemorySpace.SMEM),  # fc2 bias scalar
        ],
        out_specs=pl.BlockSpec((1, tb), lambda i, k: (0, i)),   # lane-dense row
        scratch_shapes=[pltpu.VMEM((tb, H2), jnp.float32)],
        compiler_params=pltpu.CompilerParams(
            dimension_semantics=("parallel", "arbitrary"),
            vmem_limit_bytes=vmem_limit),
        cost_estimate=cost,
    )(x, w1t, b1, w2, b2)

    # (1, B) lane-dense row -> (B, 1) column.
    return out_row.reshape(B, 1)


if __name__ == "__main__":
    key = jax.random.PRNGKey(0)

    def make_problem(key, hidden_size, B):
        H2 = hidden_size // 2
        kx, k1, k2, k3, k4 = jax.random.split(key, 5)
        bound1 = 1.0 / (hidden_size ** 0.5)
        bound2 = 1.0 / (H2 ** 0.5)
        x = jax.random.normal(kx, (B, hidden_size), dtype=jnp.float32)
        w1 = jax.random.uniform(k1, (H2, hidden_size), jnp.float32, -bound1, bound1)
        b1 = jax.random.uniform(k2, (H2,), jnp.float32, -bound1, bound1)
        w2 = jax.random.uniform(k3, (1, H2), jnp.float32, -bound2, bound2)
        b2 = jax.random.uniform(k4, (1,), jnp.float32, -bound2, bound2)
        ref = jnp.maximum(x @ w1.T + b1, 0.0) @ w2.T + b2
        return x, (w1, b1, w2, b2), ref

    # --- Test 1: module-scale shapes (hidden=32, B=16), single grid step ----
    k1_, k2_ = jax.random.split(key)
    x, raw, ref = make_problem(k1_, hidden_size=32, B=16)

    params_f32 = prepare_params(*raw)                              # f32 weights
    out = jax.block_until_ready(mlp_forward(x, **params_f32))
    assert out.shape == (16, 1), out.shape
    assert jnp.allclose(out, ref, atol=1e-5, rtol=1e-5), "f32 mismatch vs reference"

    params_bf16 = prepare_params(*raw, compute_dtype=jnp.bfloat16)  # cast once
    out_bf16 = jax.block_until_ready(mlp_forward(x, **params_bf16))
    assert out_bf16.shape == (16, 1), out_bf16.shape
    assert jnp.allclose(out_bf16, ref, atol=5e-2, rtol=5e-2), "bf16 mismatch vs reference"

    # --- Test 2: exercise batch tiling + K-tiled accumulator path -----------
    x2, raw2, ref2 = make_problem(k2_, hidden_size=256, B=256)
    params2 = prepare_params(*raw2)
    # tile_k=128 forces nk=2 (accumulator path); B=256 splits into two 128-row
    # batch tiles (megacore-friendly), all blocks exact.
    out2 = jax.block_until_ready(mlp_forward(x2, **params2, tile_k=128))
    assert out2.shape == (256, 1), out2.shape
    assert jnp.allclose(out2, ref2, atol=1e-3, rtol=1e-3), "tiled f32 mismatch vs reference"

    print("KERNEL_OK")
</pallas_src>

<mosaic_0001>
module attributes {stable_mosaic.version = 11 : i64} {
  func.func @mlp_kernel(%arg0: i32, %arg1: i32, %arg2: memref<16x32xf32, #tpu.memory_space<vmem>>, %arg3: memref<32x16xf32, #tpu.memory_space<vmem>>, %arg4: memref<1x16xf32, #tpu.memory_space<vmem>>, %arg5: memref<1x16xf32, #tpu.memory_space<vmem>>, %arg6: memref<1xf32, #tpu.memory_space<smem>>, %arg7: memref<1x16xf32, #tpu.memory_space<vmem>>, %arg8: memref<16x16xf32, #tpu.memory_space<vmem>>) attributes {dimension_semantics = [#tpu.dimension_semantics<parallel>, #tpu.dimension_semantics<arbitrary>], iteration_bounds = array<i64: 1, 1>, scalar_prefetch = 0 : i64, scratch_operands = 1 : i64, tpu.core_type = #tpu.core_type<tc>, window_params = [{transform_indices = @transform_0, window_bounds = array<i64: 16, 32>}, {transform_indices = @transform_1, window_bounds = array<i64: 32, 16>}, {pipeline_mode = #tpu.pipeline_mode<synchronous>, transform_indices = @transform_2, window_bounds = array<i64: 1, 16>}, {pipeline_mode = #tpu.pipeline_mode<synchronous>, transform_indices = @transform_3, window_bounds = array<i64: 1, 16>}, {transform_indices = @transform_4, window_bounds = array<i64: 1>}, {transform_indices = @transform_5, window_bounds = array<i64: 1, 16>}]} {
    %c0_i32 = arith.constant 0 : i32
    %0 = arith.cmpi eq, %arg1, %c0_i32 : i32
    %1 = arith.extui %0 : i1 to i32
    %c0_i32_0 = arith.constant 0 : i32
    %2 = arith.cmpi ne, %1, %c0_i32_0 : i32
    scf.if %2 {
      %cst_10 = arith.constant 0.000000e+00 : f32
      %12 = vector.broadcast %cst_10 : f32 to vector<16x16xf32>
      %c0_11 = arith.constant 0 : index
      %c0_12 = arith.constant 0 : index
      %13 = vector.load %arg8[%c0_11, %c0_12] : memref<16x16xf32, #tpu.memory_space<vmem>>, vector<16x16xf32>
      tpu.vector_store %arg8[%c0_11, %c0_12], %12 {strides = array<i32>} : memref<16x16xf32, #tpu.memory_space<vmem>>, vector<16x16xf32>,
    } else {
    }
    %c0 = arith.constant 0 : index
    %c0_1 = arith.constant 0 : index
    %3 = vector.load %arg8[%c0, %c0_1] : memref<16x16xf32, #tpu.memory_space<vmem>>, vector<16x16xf32>
    %c0_2 = arith.constant 0 : index
    %c0_3 = arith.constant 0 : index
    %4 = vector.load %arg2[%c0_2, %c0_3] : memref<16x32xf32, #tpu.memory_space<vmem>>, vector<16x32xf32>
    %c0_4 = arith.constant 0 : index
    %c0_5 = arith.constant 0 : index
    %5 = vector.load %arg3[%c0_4, %c0_5] : memref<32x16xf32, #tpu.memory_space<vmem>>, vector<32x16xf32>
    %cst = arith.constant dense<0.000000e+00> : vector<16x16xf32>
    %6 = tpu.matmul %4, %5, %cst {dimension_numbers = #tpu.dot_dimension_numbers<[1], [0], [0], [1], [0, 0, 1, 1], [], []>} : vector<16x32xf32>, vector<32x16xf32>, vector<16x16xf32> -> vector<16x16xf32>
    %7 = arith.addf %3, %6 : vector<16x16xf32>
    %c0_6 = arith.constant 0 : index
    %c0_7 = arith.constant 0 : index
    %8 = vector.load %arg8[%c0_6, %c0_7] : memref<16x16xf32, #tpu.memory_space<vmem>>, vector<16x16xf32>
    tpu.vector_store %arg8[%c0_6, %c0_7], %7 {strides = array<i32>} : memref<16x16xf32, #tpu.memory_space<vmem>>, vector<16x16xf32>,
    %c0_i32_8 = arith.constant 0 : i32
    %9 = arith.cmpi eq, %arg1, %c0_i32_8 : i32
    %10 = arith.extui %9 : i1 to i32
    %c0_i32_9 = arith.constant 0 : i32
    %11 = arith.cmpi ne, %10, %c0_i32_9 : i32
    scf.if %11 {
      %c0_10 = arith.constant 0 : index
      %c0_11 = arith.constant 0 : index
      %12 = vector.load %arg8[%c0_10, %c0_11] : memref<16x16xf32, #tpu.memory_space<vmem>>, vector<16x16xf32>
      %c0_12 = arith.constant 0 : index
      %c0_13 = arith.constant 0 : index
      %13 = vector.load %arg4[%c0_12, %c0_13] : memref<1x16xf32, #tpu.memory_space<vmem>>, vector<1x16xf32>
      %14 = vector.broadcast %13 : vector<1x16xf32> to vector<16x16xf32>
      %15 = arith.addf %12, %14 : vector<16x16xf32>
      %cst_14 = arith.constant 0.000000e+00 : f32
      %16 = vector.broadcast %cst_14 : f32 to vector<16x16xf32>
      %17 = arith.maximumf %15, %16 : vector<16x16xf32>
      %c0_15 = arith.constant 0 : index
      %c0_16 = arith.constant 0 : index
      %18 = vector.load %arg5[%c0_15, %c0_16] : memref<1x16xf32, #tpu.memory_space<vmem>>, vector<1x16xf32>
      %cst_17 = arith.constant dense<0.000000e+00> : vector<1x16xf32>
      %19 = tpu.matmul %18, %17, %cst_17 {dimension_numbers = #tpu.dot_dimension_numbers<[1], [1], [0], [0], [0, 0, 1, 0], [], []>} : vector<1x16xf32>, vector<16x16xf32>, vector<1x16xf32> -> vector<1x16xf32>
      %c0_18 = arith.constant 0 : index
      %20 = memref.load %arg6[%c0_18] : memref<1xf32, #tpu.memory_space<smem>>
      %21 = vector.broadcast %20 : f32 to vector<1x16xf32>
      %22 = arith.addf %19, %21 : vector<1x16xf32>
      %c0_19 = arith.constant 0 : index
      %c0_20 = arith.constant 0 : index
      %23 = vector.load %arg7[%c0_19, %c0_20] : memref<1x16xf32, #tpu.memory_space<vmem>>, vector<1x16xf32>
      tpu.vector_store %arg7[%c0_19, %c0_20], %22 {strides = array<i32>} : memref<1x16xf32, #tpu.memory_space<vmem>>, vector<1x16xf32>,
    } else {
    }
    return
  }
  func.func @transform_0(%arg0: i32, %arg1: i32) -> (i32, i32) {
    %c0_i32 = arith.constant 0 : i32
    return %arg0, %arg1 : i32, i32
  }
  func.func @transform_1(%arg0: i32, %arg1: i32) -> (i32, i32) {
    %c0_i32 = arith.constant 0 : i32
    %c0_i32_0 = arith.constant 0 : i32
    return %arg1, %c0_i32 : i32, i32
  }
  func.func @transform_2(%arg0: i32, %arg1: i32) -> (i32, i32) {
    %c0_i32 = arith.constant 0 : i32
    %c0_i32_0 = arith.constant 0 : i32
    %c0_i32_1 = arith.constant 0 : i32
    return %c0_i32, %c0_i32_0 : i32, i32
  }
  func.func @transform_3(%arg0: i32, %arg1: i32) -> (i32, i32) {
    %c0_i32 = arith.constant 0 : i32
    %c0_i32_0 = arith.constant 0 : i32
    %c0_i32_1 = arith.constant 0 : i32
    return %c0_i32, %c0_i32_0 : i32, i32
  }
  func.func @transform_4(%arg0: i32, %arg1: i32) -> i32 {
    %c0_i32 = arith.constant 0 : i32
    %c0_i32_0 = arith.constant 0 : i32
    return %c0_i32 : i32
  }
  func.func @transform_5(%arg0: i32, %arg1: i32) -> (i32, i32) {
    %c0_i32 = arith.constant 0 : i32
    %c0_i32_0 = arith.constant 0 : i32
    return %c0_i32, %arg0 : i32, i32
  }
}

</mosaic_0001>

<llo_original>
// kernel: mlp_forward.1
$region0: #{mlp_forward.1}
  #allocation0 [shape = 'u32[]', space=smem, size = 0x4, offset = 0x4, fixed_abs, tag = 'smem constant byte address 0x4 - core index']
  #allocation1 [shape = 'u32[144,128]{1,0:T(1,128)}', space=vmem, size = 0x12000, scoped, tag = 'internal scratch']
  #allocation2 [shape = 'f32[16,16]{1,0:T(8,128)}', space=vmem, size = 0x2000, scoped, tag = 'scratch operand']
  #allocation3 [shape = 'f32[1]{0:T(128)S(6)}', space=smem, size = 0x200, scoped, tag = 'scoped memory for mlp_forward.1']
  %s0 = inlined_call_operand.vmem [shape: f32[16,32], index: 0, kind: input, shape index: {}]
  %s1 = inlined_call_operand.vmem [shape: f32[32,16], index: 1, kind: input, shape index: {}]
  %s2 = inlined_call_operand.vmem [shape: f32[1,16], index: 2, kind: input, shape index: {}]
  %s3 = inlined_call_operand.vmem [shape: f32[1,16], index: 3, kind: input, shape index: {}]
  %s4 = inlined_call_operand.<no memory space> [shape: f32[1], index: 4, kind: input, shape index: {}]
  %s5 = inlined_call_operand.hbm [shape: f32[1,16], index: 5, kind: output, shape index: {}]
  %s6 = sld [smem:[#allocation0]]
  $region38: #{mlp_forward.1} parent=0
    _
  %s8 = ssub.s32 1, %s6
  %s9 = scalar_select 0, %s8, %s6
  %10 = sst [smem:[#allocation3]] %s4
  $region1: #{mlp_forward.1} parent=0
    #allocation4 [shape = 'u8[512]{0}', space=vmem, size = 0x400, scoped, tag = 'output window, operand 0, single buffered']
    #allocation5 [shape = 's32[1]{0}', space=sflag, size = 0x4, scoped, tag = 'scoped memory for mlp_forward.1']
    %11 = vsyncpa [#allocation5], 0
    // Predicated region
    $region2: #{mlp_forward.1} parent=1 // pred_check
      _
    $region3: #{mlp_forward.1} parent=1 // pred_check_branch
      %13 = sbr.rel (0) target = $region5
    $region4: #{mlp_forward.1} parent=1 // pred_region
      _
    $region5: #{mlp_forward.1} parent=1 // pred_fallthru
      _
    // Predicated region
    $region6: #{mlp_forward.1} parent=1 // pred_check
      _
    $region7: #{mlp_forward.1} parent=1 // pred_check_branch
      %15 = sbr.rel (0) target = $region9
    $region8: #{mlp_forward.1} parent=1 // pred_region
      _
    $region9: #{mlp_forward.1} parent=1 // pred_fallthru
      _
    // Predicated region
    $region10: #{mlp_forward.1} parent=1 // pred_check
      _
    $region11: #{mlp_forward.1} parent=1 // pred_check_branch
      %17 = sbr.rel (0) target = $region13
    $region12: #{mlp_forward.1} parent=1 // pred_region
      _
    $region13: #{mlp_forward.1} parent=1 // pred_fallthru
      _
    // Predicated region
    $region14: #{mlp_forward.1} parent=1 // pred_check
      _
    $region15: #{mlp_forward.1} parent=1 // pred_check_branch
      %19 = sbr.rel (0) target = $region17
    $region16: #{mlp_forward.1} parent=1 // pred_region
      _
    $region17: #{mlp_forward.1} parent=1 // pred_fallthru
      _
    // Predicated region
    $region18: #{mlp_forward.1} parent=1 // pred_check
      _
    $region19: #{mlp_forward.1} parent=1 // pred_check_branch
      %21 = sbr.rel (0) target = $region21
    $region20: #{mlp_forward.1} parent=1 // pred_region
      _
    $region21: #{mlp_forward.1} parent=1 // pred_fallthru
      _
    %p22 = scmp.eq.s32.totalorder 0, 0
    // Predicated region
    $region22: #{mlp_forward.1} parent=1 // pred_check
      %p23 = pneg %p22
    $region23: #{mlp_forward.1} parent=1 // pred_check_branch
      %25 = sbr.rel (%p23) target = $region25
    $region24: #{mlp_forward.1} parent=1 // pred_region
      %vm26 = vcmask 130048
      %27 = vst.msk [vmem:[#allocation2] sm:$0xff] %vm26, 0.0
      %28 = vst.msk [vmem:[#allocation2 + $0x8] sm:$0xff] %vm26, 0.0
    $region25: #{mlp_forward.1} parent=1 // pred_fallthru
      _
    %v29 = vld [vmem:[#allocation2] sm:$0xff]
    %v30 = vld [vmem:[#allocation2 + $0x8] sm:$0xff]
    %v31 = vld [vmem:[%s0] sm:$0xff]
    %v32 = vld [vmem:[%s0 + $0x8] sm:$0xff]
    %v33 = vld [vmem:[%s1] sm:$0xff]
    %v34 = vld [vmem:[%s1 + $0x8] sm:$0xff]
    %v35 = vld [vmem:[%s1 + $0x10] sm:$0xff]
    %v36 = vld [vmem:[%s1 + $0x18] sm:$0xff]
    %vm37 = vcmask 261120
    %v39 = vsel %vm37, %v31, 0
    %v42 = vsel %vm37, %v32, 0
    %44 = vmatprep.subr.mxu0 0.0
    %45 = vmatpush1.msra.mxu0 0.0
    %46 = vmatprep.subr.mxu0 0.0
    %47 = vmatpush1.msra.mxu0 0.0
    %48 = vmatprep.subr.mxu0 0.0
    %49 = vmatpush1.msra.mxu0 0.0
    %50 = vmatprep.subr.mxu0 0.0
    %51 = vmatpush1.msra.mxu0 0.0
    %52 = vmatprep.subr.mxu0 0.0
    %53 = vmatpush1.msra.mxu0 0.0
    %54 = vmatprep.subr.mxu0 0.0
    %55 = vmatpush1.msra.mxu0 0.0
    %56 = vmatprep.subr.mxu0 0.0
    %57 = vmatpush1.msra.mxu0 0.0
    %58 = vmatprep.subr.mxu0 0.0
    %59 = vmatpush1.msra.mxu0 0.0
    %60 = vmatprep.subr.mxu0 0.0
    %61 = vmatpush1.msra.mxu0 0.0
    %62 = vmatprep.subr.mxu0 0.0
    %63 = vmatpush1.msra.mxu0 0.0
    %64 = vmatprep.subr.mxu0 0.0
    %65 = vmatpush1.msra.mxu0 0.0
    %66 = vmatprep.subr.mxu0 0.0
    %67 = vmatpush1.msra.mxu0 0.0
    %68 = vmatprep.subr.mxu0 0.0
    %69 = vmatpush1.msra.mxu0 %v36
    %70 = vmatprep.subr.mxu0 0.0
    %71 = vmatpush1.msra.mxu0 %v35
    %72 = vmatprep.subr.mxu0 0.0
    %73 = vmatpush1.msra.mxu0 %v34
    %74 = vmatprep.subr.mxu0 0.0
    %75 = vmatpush1.msra.mxu0 %v33
    %76 = vmatprep.subr.mxu0 0.0
    %77 = vmatpush2.msra.mxu0 0.0
    %78 = vmatprep.subr.mxu0 0.0
    %79 = vmatpush2.msra.mxu0 0.0
    %80 = vmatprep.subr.mxu0 0.0
    %81 = vmatpush2.msra.mxu0 0.0
    %82 = vmatprep.subr.mxu0 0.0
    %83 = vmatpush2.msra.mxu0 0.0
    %84 = vmatprep.subr.mxu0 0.0
    %85 = vmatpush2.msra.mxu0 0.0
    %86 = vmatprep.subr.mxu0 0.0
    %87 = vmatpush2.msra.mxu0 0.0
    %88 = vmatprep.subr.mxu0 0.0
    %89 = vmatpush2.msra.mxu0 0.0
    %90 = vmatprep.subr.mxu0 0.0
    %91 = vmatpush2.msra.mxu0 0.0
    %92 = vmatprep.subr.mxu0 0.0
    %93 = vmatpush2.msra.mxu0 0.0
    %94 = vmatprep.subr.mxu0 0.0
    %95 = vmatpush2.msra.mxu0 0.0
    %96 = vmatprep.subr.mxu0 0.0
    %97 = vmatpush2.msra.mxu0 0.0
    %98 = vmatprep.subr.mxu0 0.0
    %99 = vmatpush2.msra.mxu0 0.0
    %100 = vmatprep.subr.mxu0 0.0
    %101 = vmatpush2.msra.mxu0 0.0
    %102 = vmatprep.subr.mxu0 0.0
    %103 = vmatpush2.msra.mxu0 0.0
    %104 = vmatprep.subr.mxu0 0.0
    %105 = vmatpush2.msra.mxu0 0.0
    %106 = vmatprep.subr.mxu0 0.0
    %107 = vmatpush2.msra.mxu0 0.0
    %108 = vmatprep.mubr.f32.mxu0 0.0
    %109 = vmatmul.mubr.f32.gmra.mxu0 %v39
    %v110 = vpop.f32.mrf.mxu0
    %v111 = vadd.f32 0.0, %v110
    %v112 = vpop.f32.mrf.mxu0
    %113 = vmatprep.mubr.f32.mxu0 0.0
    %114 = vmatmul.mubr.f32.gmra.mxu0 %v42
    %v115 = vpop.f32.mrf.mxu0
    %v116 = vadd.f32 0.0, %v115
    %v117 = vpop.f32.mrf.mxu0
    %118 = vdwg.mxu0
    %v119 = vadd.f32 %v29, %v111
    %v120 = vadd.f32 %v30, %v116
    %vm121 = vcmask 130048
    %122 = vst.msk [vmem:[#allocation2] sm:$0xff] %vm121, %v119
    %123 = vst.msk [vmem:[#allocation2 + $0x8] sm:$0xff] %vm121, %v120
    // Predicated region
    $region26: #{mlp_forward.1} parent=1 // pred_check
      %p124 = pneg %p22
    $region27: #{mlp_forward.1} parent=1 // pred_check_branch
      %126 = sbr.rel (%p124) target = $region29
    $region28: #{mlp_forward.1} parent=1 // pred_region
      %v127 = vld [vmem:[#allocation2] sm:$0xff]
      %v128 = vld [vmem:[#allocation2 + $0x8] sm:$0xff]
      %v129 = vld [vmem:[%s2] sm:$0x1]
      %v131 = vlaneseq
      %v132 = vshrl.u32 %v131, 7
      %v133 = vsub.s32 0, %v132
      %v134 = vrot.slane %v129, %v133
      %v136 = vadd.f32 %v127, %v134
      %v137 = vadd.f32 %v128, %v134
      %v138 = vmax.f32 %v136, 0.0
      %v139 = vmax.f32 %v137, 0.0
      %v140 = vld [vmem:[%s3] sm:$0x1]
      %s141 = sld [smem:[#allocation3]]
      %v142 = vstv %s141
      %v144 = vsel %vm121, %v140, 0
      %v147 = vsel %vm121, %v138, 0
      %v150 = vsel %vm121, %v139, 0
      %152 = vmatprep.subr.mxu0 0.0
      %153 = vmatpush1.xpose.msra.mxu0 0.0
      %154 = vmatprep.subr.mxu0 0.0
      %155 = vmatpush1.xpose.msra.mxu0 0.0
      %156 = vmatprep.subr.mxu0 0.0
      %157 = vmatpush1.xpose.msra.mxu0 0.0
      %158 = vmatprep.subr.mxu0 0.0
      %159 = vmatpush1.xpose.msra.mxu0 0.0
      %160 = vmatprep.subr.mxu0 0.0
      %161 = vmatpush1.xpose.msra.mxu0 0.0
      %162 = vmatprep.subr.mxu0 0.0
      %163 = vmatpush1.xpose.msra.mxu0 0.0
      %164 = vmatprep.subr.mxu0 0.0
      %165 = vmatpush1.xpose.msra.mxu0 0.0
      %166 = vmatprep.subr.mxu0 0.0
      %167 = vmatpush1.xpose.msra.mxu0 0.0
      %168 = vmatprep.subr.mxu0 0.0
      %169 = vmatpush1.xpose.msra.mxu0 0.0
      %170 = vmatprep.subr.mxu0 0.0
      %171 = vmatpush1.xpose.msra.mxu0 0.0
      %172 = vmatprep.subr.mxu0 0.0
      %173 = vmatpush1.xpose.msra.mxu0 0.0
      %174 = vmatprep.subr.mxu0 0.0
      %175 = vmatpush1.xpose.msra.mxu0 0.0
      %176 = vmatprep.subr.mxu0 0.0
      %177 = vmatpush1.xpose.msra.mxu0 0.0
      %178 = vmatprep.subr.mxu0 0.0
      %179 = vmatpush1.xpose.msra.mxu0 0.0
      %180 = vmatprep.subr.mxu0 0.0
      %181 = vmatpush1.xpose.msra.mxu0 %v150
      %182 = vmatprep.subr.mxu0 0.0
      %183 = vmatpush1.xpose.msra.mxu0 %v147
      %184 = vmatprep.subr.mxu0 0.0
      %185 = vmatpush2.xpose.msra.mxu0 0.0
      %186 = vmatprep.subr.mxu0 0.0
      %187 = vmatpush2.xpose.msra.mxu0 0.0
      %188 = vmatprep.subr.mxu0 0.0
      %189 = vmatpush2.xpose.msra.mxu0 0.0
      %190 = vmatprep.subr.mxu0 0.0
      %191 = vmatpush2.xpose.msra.mxu0 0.0
      %192 = vmatprep.subr.mxu0 0.0
      %193 = vmatpush2.xpose.msra.mxu0 0.0
      %194 = vmatprep.subr.mxu0 0.0
      %195 = vmatpush2.xpose.msra.mxu0 0.0
      %196 = vmatprep.subr.mxu0 0.0
      %197 = vmatpush2.xpose.msra.mxu0 0.0
      %198 = vmatprep.subr.mxu0 0.0
      %199 = vmatpush2.xpose.msra.mxu0 0.0
      %200 = vmatprep.subr.mxu0 0.0
      %201 = vmatpush2.xpose.msra.mxu0 0.0
      %202 = vmatprep.subr.mxu0 0.0
      %203 = vmatpush2.xpose.msra.mxu0 0.0
      %204 = vmatprep.subr.mxu0 0.0
      %205 = vmatpush2.xpose.msra.mxu0 0.0
      %206 = vmatprep.subr.mxu0 0.0
      %207 = vmatpush2.xpose.msra.mxu0 0.0
      %208 = vmatprep.subr.mxu0 0.0
      %209 = vmatpush2.xpose.msra.mxu0 0.0
      %210 = vmatprep.subr.mxu0 0.0
      %211 = vmatpush2.xpose.msra.mxu0 0.0
      %212 = vmatprep.subr.mxu0 0.0
      %213 = vmatpush2.xpose.msra.mxu0 0.0
      %214 = vmatprep.subr.mxu0 0.0
      %215 = vmatpush2.xpose.msra.mxu0 0.0
      %216 = vmatprep.mubr.f32.mxu0 0.0
      %217 = vmatmul.mubr.f32.gmra.mxu0 %v144
      %v218 = vpop.f32.mrf.mxu0
      %v219 = vadd.f32 %v142, %v218
      %v220 = vpop.f32.mrf.mxu0
      %221 = vdwg.mxu0
      %vm222 = vcmask 122880
      %223 = vst.msk [vmem:[#allocation4] sm:$0x1] %vm222, %v219
    $region29: #{mlp_forward.1} parent=1 // pred_fallthru
      _
    // Predicated region
    $region30: #{mlp_forward.1} parent=1 // pred_check
      _
    $region31: #{mlp_forward.1} parent=1 // pred_check_branch
      %225 = sbr.rel (0) target = $region33
    $region32: #{mlp_forward.1} parent=1 // pred_region
      %s227 = ssub.s32 16, 16
      %228 = vsyncadd [#allocation5], %s227
      %s230 = sshll.u32 [#allocation4], 4
      %s231 = int_to_ptr.vmem [resolvable:$true] %s230
      %233 = dma.vmem_to_hbm [thread:$0]  %s231, 16, %s5, [#allocation5]
    $region33: #{mlp_forward.1} parent=1 // pred_fallthru
      _
    // Predicated region
    $region34: #{mlp_forward.1} parent=1 // pred_check
      _
    $region35: #{mlp_forward.1} parent=1 // pred_check_branch
      %235 = sbr.rel (0) target = $region37
    $region36: #{mlp_forward.1} parent=1 // pred_region
      %236 = dma.done [#allocation5], 16
    $region37: #{mlp_forward.1} parent=1 // pred_fallthru
      _
    %237 = vsyncpa [#allocation5], 1

</llo_original>
